<compile_context>
chip_gen: v7x
topology: tpu7x:2x2x1
jax: 0.10.0
libtpu: 0.0.40
codegen_flags: <defaults>
</compile_context>

<pallas_src>
import functools

import jax
import jax.numpy as jnp
from jax.experimental import pallas as pl
from jax.experimental.pallas import tpu as pltpu

_LANE = 128
_MAX_TILE = 2048                      # batch lanes per grid step
_VMEM_LIMIT = 32 * 1024 * 1024        # explicit scoped-VMEM limit (v5e default is 16 MiB)


def _round_up(x, m):
    return ((x + m - 1) // m) * m


def _plan_tiles(batch, max_tile=_MAX_TILE):
    """Pick (tile, n_tiles, padded_batch).

    tile is a multiple of 128; batches larger than one tile are split into
    >= 2 tiles (keeps both v7x TensorCores busy); padded_batch = tile*n_tiles.
    """
    b_lane = max(_LANE, _round_up(batch, _LANE))
    if b_lane <= max_tile:
        return b_lane, 1, b_lane
    n_tiles = -(-b_lane // max_tile)                     # ceil
    tile = _round_up(-(-b_lane // n_tiles), _LANE)
    return tile, n_tiles, tile * n_tiles


# -----------------------------------------------------------------------------
# Pallas kernel: fc1 + ReLU, then GRUCell (or Linear+ReLU), transposed layout
# -----------------------------------------------------------------------------
def _actor_dummy_kernel(xt_ref, ht_ref, slab_ref, hout_ref, *,
                        input_dim, hidden_dim, use_rnn):
    """All operands in (feature, batch) layout: batch on lanes, features on sublanes."""
    H, IN = hidden_dim, input_dim
    BC = max(IN, H)                             # bias column index in the slab

    xt = xt_ref[...]                            # (IN, TB)
    ht = ht_ref[...]                            # (H,  TB)

    # fc1 + ReLU:  a1^T = relu(W1 @ x^T + b1)
    w1 = slab_ref[0:H, 0:IN]                    # (H, IN), torch (out, in) layout
    b1 = slab_ref[0:H, BC:BC + 1]               # (H, 1) -> broadcast over lanes
    a1 = jnp.maximum(
        jnp.dot(w1, xt, preferred_element_type=jnp.float32) + b1, 0.0)

    if use_rnn:
        # GRUCell (PyTorch gate order r, z, n).  Two dots, no operand concat.
        w_ih = slab_ref[H:4 * H, 0:H]
        b_ih = slab_ref[H:4 * H, BC:BC + 1]
        w_hh = slab_ref[4 * H:7 * H, 0:H]
        b_hh = slab_ref[4 * H:7 * H, BC:BC + 1]
        gi = jnp.dot(w_ih, a1, preferred_element_type=jnp.float32) + b_ih   # (3H, TB)
        gh = jnp.dot(w_hh, ht, preferred_element_type=jnp.float32) + b_hh   # (3H, TB)
        r = jax.nn.sigmoid(gi[0:H] + gh[0:H])
        z = jax.nn.sigmoid(gi[H:2 * H] + gh[H:2 * H])
        n = jnp.tanh(gi[2 * H:3 * H] + r * gh[2 * H:3 * H])
        h_new = (1.0 - z) * n + z * ht
    else:
        # rnn = Linear(H, H) followed by ReLU
        w_r = slab_ref[H:2 * H, 0:H]
        b_r = slab_ref[H:2 * H, BC:BC + 1]
        h_new = jnp.maximum(
            jnp.dot(w_r, a1, preferred_element_type=jnp.float32) + b_r, 0.0)

    hout_ref[...] = h_new.astype(hout_ref.dtype)
    # fc2 and the q writes are intentionally NOT in the kernel: fc2's result is
    # fully overwritten by the dummy policy, and q depends only on `inputs`.


# -----------------------------------------------------------------------------
# One-time parameter packing: everything into a single f32 slab
# -----------------------------------------------------------------------------
def pack_actor_dummy_params(w1, b1, wr_a, br_a, wr_b=None, br_b=None, *,
                            input_dim, hidden_dim, use_rnn):
    """Pack fc1 + rnn weights/biases into one slab (biases in the last column).

    use_rnn=True : wr_a/br_a = GRU weight_ih/bias_ih (3H,H)/(3H,),
                   wr_b/br_b = weight_hh/bias_hh.
    use_rnn=False: wr_a/br_a = Linear(H,H) weight/bias; wr_b/br_b unused.
    """
    H, IN = hidden_dim, input_dim
    BC = max(IN, H)
    rows = 7 * H if use_rnn else 2 * H
    slab = jnp.zeros((rows, BC + 1), jnp.float32)
    slab = slab.at[0:H, 0:IN].set(jnp.asarray(w1, jnp.float32))
    slab = slab.at[0:H, BC].set(jnp.asarray(b1, jnp.float32))
    if use_rnn:
        slab = slab.at[H:4 * H, 0:H].set(jnp.asarray(wr_a, jnp.float32))
        slab = slab.at[H:4 * H, BC].set(jnp.asarray(br_a, jnp.float32))
        slab = slab.at[4 * H:7 * H, 0:H].set(jnp.asarray(wr_b, jnp.float32))
        slab = slab.at[4 * H:7 * H, BC].set(jnp.asarray(br_b, jnp.float32))
    else:
        slab = slab.at[H:2 * H, 0:H].set(jnp.asarray(wr_a, jnp.float32))
        slab = slab.at[H:2 * H, BC].set(jnp.asarray(br_a, jnp.float32))
    return slab


# -----------------------------------------------------------------------------
# Forward builder: returns a jitted (inputs, hidden_state) -> (q, h)
# -----------------------------------------------------------------------------
def make_actor_dummy_forward(slab, *, input_dim, hidden_dim, n_actions, use_rnn,
                             dummy_policy_action, max_tile=_MAX_TILE):
    threshold_cfg = None
    dummy_action = 0
    if isinstance(dummy_policy_action, dict):
        threshold_cfg = (tuple(float(t) for t in dummy_policy_action['thesholds']),
                         tuple(int(a) for a in dummy_policy_action['actions']))
    else:
        dummy_action = int(dummy_policy_action)

    kernel = functools.partial(_actor_dummy_kernel,
                               input_dim=input_dim,
                               hidden_dim=hidden_dim,
                               use_rnn=use_rnn)
    slab_shape = slab.shape

    @jax.jit
    def fwd(inputs, hidden_state):
        x = inputs.astype(jnp.float32)                                    # (B, IN)
        h_in = hidden_state.reshape(-1, hidden_dim).astype(jnp.float32)   # (B, H)
        B = x.shape[0]

        tb, n_tiles, b_pad = _plan_tiles(B, max_tile)

        # Lane-dense layout: batch -> lanes (last axis), features -> sublanes.
        xt = jnp.zeros((input_dim, b_pad), jnp.float32).at[:, :B].set(x.T)
        ht = jnp.zeros((hidden_dim, b_pad), jnp.float32).at[:, :B].set(h_in.T)

        ht_out = pl.pallas_call(
            kernel,
            out_shape=jax.ShapeDtypeStruct((hidden_dim, b_pad), jnp.float32),
            grid=(n_tiles,),
            in_specs=[pl.BlockSpec((input_dim, tb), lambda i: (0, i)),
                      pl.BlockSpec((hidden_dim, tb), lambda i: (0, i)),
                      pl.BlockSpec(slab_shape, lambda i: (0, 0))],
            out_specs=pl.BlockSpec((hidden_dim, tb), lambda i: (0, i)),
            compiler_params=pltpu.CompilerParams(
                dimension_semantics=("parallel",),
                vmem_limit_bytes=_VMEM_LIMIT),
        )(xt, ht, slab)

        h = ht_out[:, :B].T                                               # (B, H)

        # Dummy-policy q (fully overwrites fc2's output in the torch module).
        NEG = jnp.float32(-10000.0)
        EPS = jnp.float32(-1e-05)
        col = jnp.arange(n_actions)[None, :]
        if threshold_cfg is not None:
            (t0, t1), (act0, act1) = threshold_cfg
            base = jnp.where(col == 0, EPS, NEG)
            pat1 = jnp.where(col == act0, EPS, NEG)
            pat2 = jnp.where(col == act1, EPS, NEG)
            m1 = x[:, 0:1] > t0
            m2 = x[:, 1:2] > t1                 # applied last -> wins (torch order)
            q = jnp.where(m2, pat2, jnp.where(m1, pat1, base))
            q = jnp.broadcast_to(q, (B, n_actions)).astype(jnp.float32)
        else:
            q = jnp.broadcast_to(jnp.where(col == dummy_action, EPS, NEG),
                                 (B, n_actions)).astype(jnp.float32)
        return q, h

    return fwd


# -----------------------------------------------------------------------------
# Pure-JAX reference (mirrors the torch module exactly)
# -----------------------------------------------------------------------------
def actor_dummy_reference(params, inputs, hidden_state, *, hidden_dim, n_actions,
                          use_rnn, dummy_policy_action):
    w1, b1, wr_a, br_a, wr_b, br_b, w2, b2 = params
    H = hidden_dim
    x = jax.nn.relu(inputs @ w1.T + b1)
    h_in = hidden_state.reshape(-1, H)
    if use_rnn:
        gi = x @ wr_a.T + br_a
        gh = h_in @ wr_b.T + br_b
        r = jax.nn.sigmoid(gi[:, :H] + gh[:, :H])
        z = jax.nn.sigmoid(gi[:, H:2 * H] + gh[:, H:2 * H])
        n = jnp.tanh(gi[:, 2 * H:] + r * gh[:, 2 * H:])
        h = (1.0 - z) * n + z * h_in
    else:
        h = jax.nn.relu(x @ wr_a.T + br_a)
    q = h @ w2.T + b2                       # kept for torch fidelity (overwritten)
    col = jnp.arange(n_actions)[None, :]
    if isinstance(dummy_policy_action, dict):
        t = dummy_policy_action['thesholds']
        a = dummy_policy_action['actions']
        q = jnp.full_like(q, -10000.0).at[:, 0].set(-1e-05)
        m1 = (inputs[:, 0] > t[0])[:, None]
        m2 = (inputs[:, 1] > t[1])[:, None]
        q = jnp.where(m1, -10000.0, q)
        q = jnp.where(m1 & (col == a[0]), -1e-05, q)
        q = jnp.where(m2, -10000.0, q)
        q = jnp.where(m2 & (col == a[1]), -1e-05, q)
    else:
        q = jnp.full_like(q, -10000.0).at[:, int(dummy_policy_action)].set(-1e-05)
    return q, h


# -----------------------------------------------------------------------------
# Deterministic parameter construction
# -----------------------------------------------------------------------------
def make_params(key, input_dim, hidden_dim, n_actions):
    ks = jax.random.split(key, 8)
    s = 0.1
    w1 = s * jax.random.normal(ks[0], (hidden_dim, input_dim), jnp.float32)
    b1 = s * jax.random.normal(ks[1], (hidden_dim,), jnp.float32)
    w_ih = s * jax.random.normal(ks[2], (3 * hidden_dim, hidden_dim), jnp.float32)
    b_ih = s * jax.random.normal(ks[3], (3 * hidden_dim,), jnp.float32)
    w_hh = s * jax.random.normal(ks[4], (3 * hidden_dim, hidden_dim), jnp.float32)
    b_hh = s * jax.random.normal(ks[5], (3 * hidden_dim,), jnp.float32)
    w2 = s * jax.random.normal(ks[6], (n_actions, hidden_dim), jnp.float32)
    b2 = s * jax.random.normal(ks[7], (n_actions,), jnp.float32)
    return w1, b1, w_ih, b_ih, w_hh, b_hh, w2, b2


if __name__ == "__main__":
    import numpy as np

    B, IN_DIM, HIDDEN, N_ACT = 8, 16, 32, 8

    key = jax.random.PRNGKey(0)
    k_in, k_h, k_p, k_big = jax.random.split(key, 4)
    inputs = jax.random.normal(k_in, (B, IN_DIM), jnp.float32)
    hidden = jax.random.normal(k_h, (B, HIDDEN), jnp.float32)
    w1, b1, w_ih, b_ih, w_hh, b_hh, w2, b2 = make_params(k_p, IN_DIM, HIDDEN, N_ACT)

    # --- config 1: use_rnn=True (GRUCell) + threshold-strategy dummy policy ---
    dpa_threshold = {'thesholds': [0.0, 0.3], 'actions': [1, 2]}
    slab_gru = pack_actor_dummy_params(w1, b1, w_ih, b_ih, w_hh, b_hh,
                                       input_dim=IN_DIM, hidden_dim=HIDDEN,
                                       use_rnn=True)
    fwd_gru = make_actor_dummy_forward(slab_gru, input_dim=IN_DIM,
                                       hidden_dim=HIDDEN, n_actions=N_ACT,
                                       use_rnn=True,
                                       dummy_policy_action=dpa_threshold)
    q1, h1 = fwd_gru(inputs, hidden)
    jax.block_until_ready((q1, h1))
    params_gru = (w1, b1, w_ih, b_ih, w_hh, b_hh, w2, b2)
    q1_ref, h1_ref = actor_dummy_reference(params_gru, inputs, hidden,
                                           hidden_dim=HIDDEN, n_actions=N_ACT,
                                           use_rnn=True,
                                           dummy_policy_action=dpa_threshold)

    # --- config 2: use_rnn=False (Linear+ReLU) + scalar dummy action ---------
    w_rnn = w_ih[:HIDDEN, :]
    b_rnn = b_ih[:HIDDEN]
    slab_lin = pack_actor_dummy_params(w1, b1, w_rnn, b_rnn,
                                       input_dim=IN_DIM, hidden_dim=HIDDEN,
                                       use_rnn=False)
    fwd_lin = make_actor_dummy_forward(slab_lin, input_dim=IN_DIM,
                                       hidden_dim=HIDDEN, n_actions=N_ACT,
                                       use_rnn=False, dummy_policy_action=3)
    q2, h2 = fwd_lin(inputs, hidden)
    jax.block_until_ready((q2, h2))
    params_lin = (w1, b1, w_rnn, b_rnn,
                  jnp.zeros((HIDDEN, HIDDEN), jnp.float32),
                  jnp.zeros((HIDDEN,), jnp.float32), w2, b2)
    q2_ref, h2_ref = actor_dummy_reference(params_lin, inputs, hidden,
                                           hidden_dim=HIDDEN, n_actions=N_ACT,
                                           use_rnn=False, dummy_policy_action=3)

    # --- config 3: big batch, not a multiple of the tile --------------------
    # B=3000 pads to 3072 and runs as 2 x 1536-lane "parallel" grid steps.
    B_BIG = 3000
    kb_in, kb_h = jax.random.split(k_big)
    inputs_big = jax.random.normal(kb_in, (B_BIG, IN_DIM), jnp.float32)
    hidden_big = jax.random.normal(kb_h, (B_BIG, HIDDEN), jnp.float32)
    q3, h3 = fwd_gru(inputs_big, hidden_big)
    jax.block_until_ready((q3, h3))
    q3_ref, h3_ref = actor_dummy_reference(params_gru, inputs_big, hidden_big,
                                           hidden_dim=HIDDEN, n_actions=N_ACT,
                                           use_rnn=True,
                                           dummy_policy_action=dpa_threshold)

    np.testing.assert_allclose(np.asarray(h1), np.asarray(h1_ref), rtol=1e-5, atol=1e-5)
    np.testing.assert_allclose(np.asarray(q1), np.asarray(q1_ref), rtol=1e-6, atol=1e-6)
    np.testing.assert_allclose(np.asarray(h2), np.asarray(h2_ref), rtol=1e-5, atol=1e-5)
    np.testing.assert_allclose(np.asarray(q2), np.asarray(q2_ref), rtol=1e-6, atol=1e-6)
    np.testing.assert_allclose(np.asarray(h3), np.asarray(h3_ref), rtol=1e-5, atol=1e-5)
    np.testing.assert_allclose(np.asarray(q3), np.asarray(q3_ref), rtol=1e-6, atol=1e-6)

    print("KERNEL_OK")
</pallas_src>

<mosaic_0001>
module attributes {stable_mosaic.version = 11 : i64} {
  func.func @_actor_dummy_kernel(%arg0: i32, %arg1: memref<16x128xf32, #tpu.memory_space<vmem>>, %arg2: memref<32x128xf32, #tpu.memory_space<vmem>>, %arg3: memref<224x33xf32, #tpu.memory_space<vmem>>, %arg4: memref<32x128xf32, #tpu.memory_space<vmem>>) attributes {dimension_semantics = [#tpu.dimension_semantics<parallel>], iteration_bounds = array<i64: 1>, scalar_prefetch = 0 : i64, scratch_operands = 0 : i64, tpu.core_type = #tpu.core_type<tc>, window_params = [{transform_indices = @transform_0, window_bounds = array<i64: 16, 128>}, {transform_indices = @transform_1, window_bounds = array<i64: 32, 128>}, {pipeline_mode = #tpu.pipeline_mode<synchronous>, transform_indices = @transform_2, window_bounds = array<i64: 224, 33>}, {transform_indices = @transform_3, window_bounds = array<i64: 32, 128>}]} {
    %c0 = arith.constant 0 : index
    %c0_0 = arith.constant 0 : index
    %0 = vector.load %arg1[%c0, %c0_0] : memref<16x128xf32, #tpu.memory_space<vmem>>, vector<16x128xf32>
    %c0_1 = arith.constant 0 : index
    %c0_2 = arith.constant 0 : index
    %1 = vector.load %arg2[%c0_1, %c0_2] : memref<32x128xf32, #tpu.memory_space<vmem>>, vector<32x128xf32>
    %c0_3 = arith.constant 0 : index
    %c0_4 = arith.constant 0 : index
    %2 = vector.load %arg3[%c0_3, %c0_4] : memref<224x33xf32, #tpu.memory_space<vmem>>, vector<32x16xf32>
    %c0_5 = arith.constant 0 : index
    %c32 = arith.constant 32 : index
    %3 = vector.load %arg3[%c0_5, %c32] : memref<224x33xf32, #tpu.memory_space<vmem>>, vector<32x1xf32>
    %cst = arith.constant dense<0.000000e+00> : vector<32x128xf32>
    %4 = tpu.matmul %2, %0, %cst {dimension_numbers = #tpu.dot_dimension_numbers<[1], [0], [0], [1], [0, 0, 1, 1], [], []>} : vector<32x16xf32>, vector<16x128xf32>, vector<32x128xf32> -> vector<32x128xf32>
    %5 = vector.broadcast %3 : vector<32x1xf32> to vector<32x128xf32>
    %6 = arith.addf %4, %5 : vector<32x128xf32>
    %cst_6 = arith.constant 0.000000e+00 : f32
    %7 = vector.broadcast %cst_6 : f32 to vector<32x128xf32>
    %8 = arith.maximumf %6, %7 : vector<32x128xf32>
    %c32_7 = arith.constant 32 : index
    %c0_8 = arith.constant 0 : index
    %9 = vector.load %arg3[%c32_7, %c0_8] : memref<224x33xf32, #tpu.memory_space<vmem>>, vector<96x32xf32>
    %c32_9 = arith.constant 32 : index
    %c32_10 = arith.constant 32 : index
    %10 = vector.load %arg3[%c32_9, %c32_10] : memref<224x33xf32, #tpu.memory_space<vmem>>, vector<96x1xf32>
    %c128 = arith.constant 128 : index
    %c0_11 = arith.constant 0 : index
    %11 = vector.load %arg3[%c128, %c0_11] : memref<224x33xf32, #tpu.memory_space<vmem>>, vector<96x32xf32>
    %c128_12 = arith.constant 128 : index
    %c32_13 = arith.constant 32 : index
    %12 = vector.load %arg3[%c128_12, %c32_13] : memref<224x33xf32, #tpu.memory_space<vmem>>, vector<96x1xf32>
    %cst_14 = arith.constant dense<0.000000e+00> : vector<96x128xf32>
    %13 = tpu.matmul %9, %8, %cst_14 {dimension_numbers = #tpu.dot_dimension_numbers<[1], [0], [0], [1], [0, 0, 1, 1], [], []>} : vector<96x32xf32>, vector<32x128xf32>, vector<96x128xf32> -> vector<96x128xf32>
    %14 = vector.broadcast %10 : vector<96x1xf32> to vector<96x128xf32>
    %15 = arith.addf %13, %14 : vector<96x128xf32>
    %cst_15 = arith.constant dense<0.000000e+00> : vector<96x128xf32>
    %16 = tpu.matmul %11, %1, %cst_15 {dimension_numbers = #tpu.dot_dimension_numbers<[1], [0], [0], [1], [0, 0, 1, 1], [], []>} : vector<96x32xf32>, vector<32x128xf32>, vector<96x128xf32> -> vector<96x128xf32>
    %17 = vector.broadcast %12 : vector<96x1xf32> to vector<96x128xf32>
    %18 = arith.addf %16, %17 : vector<96x128xf32>
    %19 = vector.extract_strided_slice %15 {offsets = [0, 0], sizes = [32, 128], strides = [1, 1]} : vector<96x128xf32> to vector<32x128xf32>
    %20 = vector.extract_strided_slice %18 {offsets = [0, 0], sizes = [32, 128], strides = [1, 1]} : vector<96x128xf32> to vector<32x128xf32>
    %21 = arith.addf %19, %20 : vector<32x128xf32>
    %22 = arith.negf %21 : vector<32x128xf32>
    %23 = math.exp %22 : vector<32x128xf32>
    %cst_16 = arith.constant 1.000000e+00 : f32
    %24 = vector.broadcast %cst_16 : f32 to vector<32x128xf32>
    %25 = arith.addf %24, %23 : vector<32x128xf32>
    %26 = arith.divf %24, %25 : vector<32x128xf32>
    %27 = vector.extract_strided_slice %15 {offsets = [32, 0], sizes = [32, 128], strides = [1, 1]} : vector<96x128xf32> to vector<32x128xf32>
    %28 = vector.extract_strided_slice %18 {offsets = [32, 0], sizes = [32, 128], strides = [1, 1]} : vector<96x128xf32> to vector<32x128xf32>
    %29 = arith.addf %27, %28 : vector<32x128xf32>
    %30 = arith.negf %29 : vector<32x128xf32>
    %31 = math.exp %30 : vector<32x128xf32>
    %cst_17 = arith.constant 1.000000e+00 : f32
    %32 = vector.broadcast %cst_17 : f32 to vector<32x128xf32>
    %33 = arith.addf %32, %31 : vector<32x128xf32>
    %34 = arith.divf %32, %33 : vector<32x128xf32>
    %35 = vector.extract_strided_slice %15 {offsets = [64, 0], sizes = [32, 128], strides = [1, 1]} : vector<96x128xf32> to vector<32x128xf32>
    %36 = vector.extract_strided_slice %18 {offsets = [64, 0], sizes = [32, 128], strides = [1, 1]} : vector<96x128xf32> to vector<32x128xf32>
    %37 = arith.mulf %26, %36 : vector<32x128xf32>
    %38 = arith.addf %35, %37 : vector<32x128xf32>
    %39 = math.tanh %38 : vector<32x128xf32>
    %cst_18 = arith.constant 1.000000e+00 : f32
    %40 = vector.broadcast %cst_18 : f32 to vector<32x128xf32>
    %41 = arith.subf %40, %34 : vector<32x128xf32>
    %42 = arith.mulf %41, %39 : vector<32x128xf32>
    %43 = arith.mulf %34, %1 : vector<32x128xf32>
    %44 = arith.addf %42, %43 : vector<32x128xf32>
    %c0_19 = arith.constant 0 : index
    %c0_20 = arith.constant 0 : index
    %45 = vector.load %arg4[%c0_19, %c0_20] : memref<32x128xf32, #tpu.memory_space<vmem>>, vector<32x128xf32>
    tpu.vector_store %arg4[%c0_19, %c0_20], %44 {strides = array<i32>} : memref<32x128xf32, #tpu.memory_space<vmem>>, vector<32x128xf32>,
    return
  }
  func.func @transform_0(%arg0: i32) -> (i32, i32) {
    %c0_i32 = arith.constant 0 : i32
    %c0_i32_0 = arith.constant 0 : i32
    return %c0_i32, %arg0 : i32, i32
  }
  func.func @transform_1(%arg0: i32) -> (i32, i32) {
    %c0_i32 = arith.constant 0 : i32
    %c0_i32_0 = arith.constant 0 : i32
    return %c0_i32, %arg0 : i32, i32
  }
  func.func @transform_2(%arg0: i32) -> (i32, i32) {
    %c0_i32 = arith.constant 0 : i32
    %c0_i32_0 = arith.constant 0 : i32
    %c0_i32_1 = arith.constant 0 : i32
    return %c0_i32, %c0_i32_0 : i32, i32
  }
  func.func @transform_3(%arg0: i32) -> (i32, i32) {
    %c0_i32 = arith.constant 0 : i32
    %c0_i32_0 = arith.constant 0 : i32
    return %c0_i32, %arg0 : i32, i32
  }
}

</mosaic_0001>

<llo_original>
// kernel: fwd.1
$region0: #{fwd.1}
  #allocation0 [shape = 'u32[]', space=smem, size = 0x4, offset = 0x4, fixed_abs, tag = 'smem constant byte address 0x4 - core index']
  #allocation1 [shape = 'u32[144,128]{1,0:T(1,128)}', space=vmem, size = 0x12000, scoped, tag = 'internal scratch']
  %s0 = inlined_call_operand.vmem [shape: f32[16,128], index: 0, kind: input, shape index: {}]
  %s1 = inlined_call_operand.vmem [shape: f32[32,128], index: 1, kind: input, shape index: {}]
  %s2 = inlined_call_operand.vmem [shape: f32[224,33], index: 2, kind: input, shape index: {}]
  %s3 = inlined_call_operand.vmem [shape: f32[32,128], index: 3, kind: output, shape index: {}]
  %s4 = sld [smem:[#allocation0]]
  $region22: #{fwd.1} parent=0
    _
  %s6 = ssub.s32 1, %s4
  %s7 = scalar_select 0, %s6, %s4
  // Predicated region
  $region2: #{fwd.1} parent=0 // pred_check
    _
  $region3: #{fwd.1} parent=0 // pred_check_branch
    %9 = sbr.rel (0) target = $region5
  $region4: #{fwd.1} parent=0 // pred_region
    _
  $region5: #{fwd.1} parent=0 // pred_fallthru
    _
  // Predicated region
  $region6: #{fwd.1} parent=0 // pred_check
    _
  $region7: #{fwd.1} parent=0 // pred_check_branch
    %11 = sbr.rel (0) target = $region9
  $region8: #{fwd.1} parent=0 // pred_region
    _
  $region9: #{fwd.1} parent=0 // pred_fallthru
    _
  // Predicated region
  $region10: #{fwd.1} parent=0 // pred_check
    _
  $region11: #{fwd.1} parent=0 // pred_check_branch
    %13 = sbr.rel (0) target = $region13
  $region12: #{fwd.1} parent=0 // pred_region
    _
  $region13: #{fwd.1} parent=0 // pred_fallthru
    _
  %v14 = vld [vmem:[%s0] sm:$0xff]
  %v15 = vld [vmem:[%s0 + $0x8] sm:$0xff]
  %v16 = vld [vmem:[%s1] sm:$0xff]
  %v17 = vld [vmem:[%s1 + $0x8] sm:$0xff]
  %v18 = vld [vmem:[%s1 + $0x10] sm:$0xff]
  %v19 = vld [vmem:[%s1 + $0x18] sm:$0xff]
  %v20 = vld [vmem:[%s2] sm:$0xff]
  %v21 = vld [vmem:[%s2 + $0x8] sm:$0xff]
  %v22 = vld [vmem:[%s2 + $0x10] sm:$0xff]
  %v23 = vld [vmem:[%s2 + $0x18] sm:$0xff]
  %25 = vset.pattern.permute.xlu0 32
  %26 = vperm.xlu0 %25, %v20
  %v27 = vpop.permute.xlu0 %26
  %30 = vset.pattern.permute.xlu0 32
  %31 = vperm.xlu0 %30, %v21
  %v32 = vpop.permute.xlu0 %31
  %35 = vset.pattern.permute.xlu0 32
  %36 = vperm.xlu0 %35, %v22
  %v37 = vpop.permute.xlu0 %36
  %40 = vset.pattern.permute.xlu0 32
  %41 = vperm.xlu0 %40, %v23
  %v42 = vpop.permute.xlu0 %41
  %vm44 = vcmask 130048
  %v45 = vsel %vm44, %v20, 0
  %v47 = vsel %vm44, %v21, 0
  %v49 = vsel %vm44, %v22, 0
  %v51 = vsel %vm44, %v23, 0
  %53 = vmatprep.subr.mxu0 0.0
  %54 = vmatpush1.msra.mxu0 %v14
  %55 = vmatprep.subr.mxu0 0.0
  %56 = vmatpush1.msra.mxu0 %v15
  %57 = vmatprep.subr.mxu0 0.0
  %58 = vmatpush1.msra.mxu0 0.0
  %59 = vmatprep.subr.mxu0 0.0
  %60 = vmatpush1.msra.mxu0 0.0
  %61 = vmatprep.subr.mxu0 0.0
  %62 = vmatpush1.msra.mxu0 0.0
  %63 = vmatprep.subr.mxu0 0.0
  %64 = vmatpush1.msra.mxu0 0.0
  %65 = vmatprep.subr.mxu0 0.0
  %66 = vmatpush1.msra.mxu0 0.0
  %67 = vmatprep.subr.mxu0 0.0
  %68 = vmatpush1.msra.mxu0 0.0
  %69 = vmatprep.subr.mxu0 0.0
  %70 = vmatpush1.msra.mxu0 0.0
  %71 = vmatprep.subr.mxu0 0.0
  %72 = vmatpush1.msra.mxu0 0.0
  %73 = vmatprep.subr.mxu0 0.0
  %74 = vmatpush1.msra.mxu0 0.0
  %75 = vmatprep.subr.mxu0 0.0
  %76 = vmatpush1.msra.mxu0 0.0
  %77 = vmatprep.subr.mxu0 0.0
  %78 = vmatpush1.msra.mxu0 0.0
  %79 = vmatprep.subr.mxu0 0.0
  %80 = vmatpush1.msra.mxu0 0.0
  %81 = vmatprep.subr.mxu0 0.0
  %82 = vmatpush1.msra.mxu0 0.0
  %83 = vmatprep.subr.mxu0 0.0
  %84 = vmatpush1.msra.mxu0 0.0
  %85 = vmatprep.subr.mxu0 0.0
  %86 = vmatpush1.msra.mxu0 0.0
  %87 = vmatprep.subr.mxu0 0.0
  %88 = vmatpush1.msra.mxu0 0.0
  %89 = vmatprep.subr.mxu0 0.0
  %90 = vmatpush1.msra.mxu0 0.0
  %91 = vmatprep.subr.mxu0 0.0
  %92 = vmatpush1.msra.mxu0 0.0
  %93 = vmatprep.subr.mxu0 0.0
  %94 = vmatpush1.msra.mxu0 0.0
  %95 = vmatprep.subr.mxu0 0.0
  %96 = vmatpush1.msra.mxu0 0.0
  %97 = vmatprep.subr.mxu0 0.0
  %98 = vmatpush1.msra.mxu0 0.0
  %99 = vmatprep.subr.mxu0 0.0
  %100 = vmatpush1.msra.mxu0 0.0
  %101 = vmatprep.subr.mxu0 0.0
  %102 = vmatpush1.msra.mxu0 0.0
  %103 = vmatprep.subr.mxu0 0.0
  %104 = vmatpush1.msra.mxu0 0.0
  %105 = vmatprep.subr.mxu0 0.0
  %106 = vmatpush1.msra.mxu0 0.0
  %107 = vmatprep.subr.mxu0 0.0
  %108 = vmatpush1.msra.mxu0 0.0
  %109 = vmatprep.subr.mxu0 0.0
  %110 = vmatpush1.msra.mxu0 0.0
  %111 = vmatprep.subr.mxu0 0.0
  %112 = vmatpush1.msra.mxu0 0.0
  %113 = vmatprep.subr.mxu0 0.0
  %114 = vmatpush1.msra.mxu0 0.0
  %115 = vmatprep.subr.mxu0 0.0
  %116 = vmatpush1.msra.mxu0 0.0
  %117 = vmatprep.mubr.f32.mxu0 0.0
  %118 = vmatmul.mubr.f32.gmra.mrb[0].mxu0 %v45
  %v119 = vpop.f32.mrb[0].mxu0
  %v120 = vadd.f32 %v27, %v119
  %v121 = vpop.f32.mrb[0].mxu0
  %122 = vmatprep.mubr.f32.mxu0 0.0
  %123 = vmatmul.mubr.f32.gmra.mrb[0].mxu0 %v47
  %v124 = vpop.f32.mrb[0].mxu0
  %v125 = vadd.f32 %v32, %v124
  %v126 = vpop.f32.mrb[0].mxu0
  %127 = vmatprep.mubr.f32.mxu0 0.0
  %128 = vmatmul.mubr.f32.gmra.mrb[0].mxu0 %v49
  %v129 = vpop.f32.mrb[0].mxu0
  %v130 = vadd.f32 %v37, %v129
  %v131 = vpop.f32.mrb[0].mxu0
  %132 = vmatprep.mubr.f32.mxu0 0.0
  %133 = vmatmul.mubr.f32.gmra.mrb[0].mxu0 %v51
  %v134 = vpop.f32.mrb[0].mxu0
  %v135 = vadd.f32 %v42, %v134
  %v136 = vpop.f32.mrb[0].mxu0
  %137 = vdwg.mxu0
  %v138 = vmax.f32 %v120, 0.0
  %v139 = vmax.f32 %v125, 0.0
  %v140 = vmax.f32 %v130, 0.0
  %v141 = vmax.f32 %v135, 0.0
  %v142 = vld [vmem:[%s2 + $0x20] sm:$0xff]
  %v143 = vld [vmem:[%s2 + $0x28] sm:$0xff]
  %v144 = vld [vmem:[%s2 + $0x30] sm:$0xff]
  %v145 = vld [vmem:[%s2 + $0x38] sm:$0xff]
  %v146 = vld [vmem:[%s2 + $0x40] sm:$0xff]
  %v147 = vld [vmem:[%s2 + $0x48] sm:$0xff]
  %v148 = vld [vmem:[%s2 + $0x50] sm:$0xff]
  %v149 = vld [vmem:[%s2 + $0x58] sm:$0xff]
  %v150 = vld [vmem:[%s2 + $0x60] sm:$0xff]
  %v151 = vld [vmem:[%s2 + $0x68] sm:$0xff]
  %v152 = vld [vmem:[%s2 + $0x70] sm:$0xff]
  %v153 = vld [vmem:[%s2 + $0x78] sm:$0xff]
  %v154 = vld [vmem:[%s2 + $0x80] sm:$0xff]
  %v155 = vld [vmem:[%s2 + $0x88] sm:$0xff]
  %v156 = vld [vmem:[%s2 + $0x90] sm:$0xff]
  %v157 = vld [vmem:[%s2 + $0x98] sm:$0xff]
  %v158 = vld [vmem:[%s2 + $0xa0] sm:$0xff]
  %v159 = vld [vmem:[%s2 + $0xa8] sm:$0xff]
  %v160 = vld [vmem:[%s2 + $0xb0] sm:$0xff]
  %v161 = vld [vmem:[%s2 + $0xb8] sm:$0xff]
  %v162 = vld [vmem:[%s2 + $0xc0] sm:$0xff]
  %v163 = vld [vmem:[%s2 + $0xc8] sm:$0xff]
  %v164 = vld [vmem:[%s2 + $0xd0] sm:$0xff]
  %v165 = vld [vmem:[%s2 + $0xd8] sm:$0xff]
  %167 = vset.pattern.permute.xlu0 32
  %168 = vperm.xlu0 %167, %v142
  %v169 = vpop.permute.xlu0 %168
  %172 = vset.pattern.permute.xlu0 32
  %173 = vperm.xlu0 %172, %v143
  %v174 = vpop.permute.xlu0 %173
  %177 = vset.pattern.permute.xlu0 32
  %178 = vperm.xlu0 %177, %v144
  %v179 = vpop.permute.xlu0 %178
  %182 = vset.pattern.permute.xlu0 32
  %183 = vperm.xlu0 %182, %v145
  %v184 = vpop.permute.xlu0 %183
  %187 = vset.pattern.permute.xlu0 32
  %188 = vperm.xlu0 %187, %v146
  %v189 = vpop.permute.xlu0 %188
  %192 = vset.pattern.permute.xlu0 32
  %193 = vperm.xlu0 %192, %v147
  %v194 = vpop.permute.xlu0 %193
  %197 = vset.pattern.permute.xlu0 32
  %198 = vperm.xlu0 %197, %v148
  %v199 = vpop.permute.xlu0 %198
  %202 = vset.pattern.permute.xlu0 32
  %203 = vperm.xlu0 %202, %v149
  %v204 = vpop.permute.xlu0 %203
  %207 = vset.pattern.permute.xlu0 32
  %208 = vperm.xlu0 %207, %v150
  %v209 = vpop.permute.xlu0 %208
  %212 = vset.pattern.permute.xlu0 32
  %213 = vperm.xlu0 %212, %v151
  %v214 = vpop.permute.xlu0 %213
  %217 = vset.pattern.permute.xlu0 32
  %218 = vperm.xlu0 %217, %v152
  %v219 = vpop.permute.xlu0 %218
  %222 = vset.pattern.permute.xlu0 32
  %223 = vperm.xlu0 %222, %v153
  %v224 = vpop.permute.xlu0 %223
  %vm226 = vcmask 261120
  %v227 = vsel %vm226, %v142, 0
  %v229 = vsel %vm226, %v143, 0
  %v231 = vsel %vm226, %v144, 0
  %v233 = vsel %vm226, %v145, 0
  %v235 = vsel %vm226, %v146, 0
  %v237 = vsel %vm226, %v147, 0
  %v239 = vsel %vm226, %v148, 0
  %v241 = vsel %vm226, %v149, 0
  %v243 = vsel %vm226, %v150, 0
  %v245 = vsel %vm226, %v151, 0
  %v247 = vsel %vm226, %v152, 0
  %v249 = vsel %vm226, %v153, 0
  %251 = vmatprep.subr.mxu0 0.0
  %252 = vmatpush1.msra.mxu0 %v138
  %253 = vmatprep.subr.mxu0 0.0
  %254 = vmatpush1.msra.mxu0 %v139
  %255 = vmatprep.subr.mxu0 0.0
  %256 = vmatpush1.msra.mxu0 %v140
  %257 = vmatprep.subr.mxu0 0.0
  %258 = vmatpush1.msra.mxu0 %v141
  %259 = vmatprep.subr.mxu0 0.0
  %260 = vmatpush1.msra.mxu0 0.0
  %261 = vmatprep.subr.mxu0 0.0
  %262 = vmatpush1.msra.mxu0 0.0
  %263 = vmatprep.subr.mxu0 0.0
  %264 = vmatpush1.msra.mxu0 0.0
  %265 = vmatprep.subr.mxu0 0.0
  %266 = vmatpush1.msra.mxu0 0.0
  %267 = vmatprep.subr.mxu0 0.0
  %268 = vmatpush1.msra.mxu0 0.0
  %269 = vmatprep.subr.mxu0 0.0
  %270 = vmatpush1.msra.mxu0 0.0
  %271 = vmatprep.subr.mxu0 0.0
  %272 = vmatpush1.msra.mxu0 0.0
  %273 = vmatprep.subr.mxu0 0.0
  %274 = vmatpush1.msra.mxu0 0.0
  %275 = vmatprep.subr.mxu0 0.0
  %276 = vmatpush1.msra.mxu0 0.0
  %277 = vmatprep.subr.mxu0 0.0
  %278 = vmatpush1.msra.mxu0 0.0
  %279 = vmatprep.subr.mxu0 0.0
  %280 = vmatpush1.msra.mxu0 0.0
  %281 = vmatprep.subr.mxu0 0.0
  %282 = vmatpush1.msra.mxu0 0.0
  %283 = vmatprep.subr.mxu0 0.0
  %284 = vmatpush1.msra.mxu0 0.0
  %285 = vmatprep.subr.mxu0 0.0
  %286 = vmatpush1.msra.mxu0 0.0
  %287 = vmatprep.subr.mxu0 0.0
  %288 = vmatpush1.msra.mxu0 0.0
  %289 = vmatprep.subr.mxu0 0.0
  %290 = vmatpush1.msra.mxu0 0.0
  %291 = vmatprep.subr.mxu0 0.0
  %292 = vmatpush1.msra.mxu0 0.0
  %293 = vmatprep.subr.mxu0 0.0
  %294 = vmatpush1.msra.mxu0 0.0
  %295 = vmatprep.subr.mxu0 0.0
  %296 = vmatpush1.msra.mxu0 0.0
  %297 = vmatprep.subr.mxu0 0.0
  %298 = vmatpush1.msra.mxu0 0.0
  %299 = vmatprep.subr.mxu0 0.0
  %300 = vmatpush1.msra.mxu0 0.0
  %301 = vmatprep.subr.mxu0 0.0
  %302 = vmatpush1.msra.mxu0 0.0
  %303 = vmatprep.subr.mxu0 0.0
  %304 = vmatpush1.msra.mxu0 0.0
  %305 = vmatprep.subr.mxu0 0.0
  %306 = vmatpush1.msra.mxu0 0.0
  %307 = vmatprep.subr.mxu0 0.0
  %308 = vmatpush1.msra.mxu0 0.0
  %309 = vmatprep.subr.mxu0 0.0
  %310 = vmatpush1.msra.mxu0 0.0
  %311 = vmatprep.subr.mxu0 0.0
  %312 = vmatpush1.msra.mxu0 0.0
  %313 = vmatprep.subr.mxu0 0.0
  %314 = vmatpush1.msra.mxu0 0.0
  %315 = vmatprep.mubr.f32.mxu0 0.0
  %316 = vmatmul.mubr.f32.gmra.mrb[0].mxu0 %v227
  %v317 = vpop.f32.mrb[0].mxu0
  %v318 = vadd.f32 %v169, %v317
  %v319 = vpop.f32.mrb[0].mxu0
  %320 = vmatprep.mubr.f32.mxu0 0.0
  %321 = vmatmul.mubr.f32.gmra.mrb[0].mxu0 %v229
  %v322 = vpop.f32.mrb[0].mxu0
  %v323 = vadd.f32 %v174, %v322
  %v324 = vpop.f32.mrb[0].mxu0
  %325 = vmatprep.mubr.f32.mxu0 0.0
  %326 = vmatmul.mubr.f32.gmra.mrb[0].mxu0 %v231
  %v327 = vpop.f32.mrb[0].mxu0
  %v328 = vadd.f32 %v179, %v327
  %v329 = vpop.f32.mrb[0].mxu0
  %330 = vmatprep.mubr.f32.mxu0 0.0
  %331 = vmatmul.mubr.f32.gmra.mrb[0].mxu0 %v233
  %v332 = vpop.f32.mrb[0].mxu0
  %v333 = vadd.f32 %v184, %v332
  %v334 = vpop.f32.mrb[0].mxu0
  %335 = vmatprep.mubr.f32.mxu0 0.0
  %336 = vmatmul.mubr.f32.gmra.mrb[0].mxu0 %v235
  %v337 = vpop.f32.mrb[0].mxu0
  %v338 = vadd.f32 %v189, %v337
  %v339 = vpop.f32.mrb[0].mxu0
  %340 = vmatprep.mubr.f32.mxu0 0.0
  %341 = vmatmul.mubr.f32.gmra.mrb[0].mxu0 %v237
  %v342 = vpop.f32.mrb[0].mxu0
  %v343 = vadd.f32 %v194, %v342
  %v344 = vpop.f32.mrb[0].mxu0
  %345 = vmatprep.mubr.f32.mxu0 0.0
  %346 = vmatmul.mubr.f32.gmra.mrb[0].mxu0 %v239
  %v347 = vpop.f32.mrb[0].mxu0
  %v348 = vadd.f32 %v199, %v347
  %v349 = vpop.f32.mrb[0].mxu0
  %350 = vmatprep.mubr.f32.mxu0 0.0
  %351 = vmatmul.mubr.f32.gmra.mrb[0].mxu0 %v241
  %v352 = vpop.f32.mrb[0].mxu0
  %v353 = vadd.f32 %v204, %v352
  %v354 = vpop.f32.mrb[0].mxu0
  %355 = vmatprep.mubr.f32.mxu0 0.0
  %356 = vmatmul.mubr.f32.gmra.mrb[0].mxu0 %v243
  %v357 = vpop.f32.mrb[0].mxu0
  %v358 = vadd.f32 %v209, %v357
  %v359 = vpop.f32.mrb[0].mxu0
  %360 = vmatprep.mubr.f32.mxu0 0.0
  %361 = vmatmul.mubr.f32.gmra.mrb[0].mxu0 %v245
  %v362 = vpop.f32.mrb[0].mxu0
  %v363 = vadd.f32 %v214, %v362
  %v364 = vpop.f32.mrb[0].mxu0
  %365 = vmatprep.mubr.f32.mxu0 0.0
  %366 = vmatmul.mubr.f32.gmra.mrb[0].mxu0 %v247
  %v367 = vpop.f32.mrb[0].mxu0
  %v368 = vadd.f32 %v219, %v367
  %v369 = vpop.f32.mrb[0].mxu0
  %370 = vmatprep.mubr.f32.mxu0 0.0
  %371 = vmatmul.mubr.f32.gmra.mrb[0].mxu0 %v249
  %v372 = vpop.f32.mrb[0].mxu0
  %v373 = vadd.f32 %v224, %v372
  %v374 = vpop.f32.mrb[0].mxu0
  %375 = vdwg.mxu0
  %377 = vset.pattern.permute.xlu0 32
  %378 = vperm.xlu0 %377, %v154
  %v379 = vpop.permute.xlu0 %378
  %382 = vset.pattern.permute.xlu0 32
  %383 = vperm.xlu0 %382, %v155
  %v384 = vpop.permute.xlu0 %383
  %387 = vset.pattern.permute.xlu0 32
  %388 = vperm.xlu0 %387, %v156
  %v389 = vpop.permute.xlu0 %388
  %392 = vset.pattern.permute.xlu0 32
  %393 = vperm.xlu0 %392, %v157
  %v394 = vpop.permute.xlu0 %393
  %397 = vset.pattern.permute.xlu0 32
  %398 = vperm.xlu0 %397, %v158
  %v399 = vpop.permute.xlu0 %398
  %402 = vset.pattern.permute.xlu0 32
  %403 = vperm.xlu0 %402, %v159
  %v404 = vpop.permute.xlu0 %403
  %407 = vset.pattern.permute.xlu0 32
  %408 = vperm.xlu0 %407, %v160
  %v409 = vpop.permute.xlu0 %408
  %412 = vset.pattern.permute.xlu0 32
  %413 = vperm.xlu0 %412, %v161
  %v414 = vpop.permute.xlu0 %413
  %417 = vset.pattern.permute.xlu0 32
  %418 = vperm.xlu0 %417, %v162
  %v419 = vpop.permute.xlu0 %418
  %422 = vset.pattern.permute.xlu0 32
  %423 = vperm.xlu0 %422, %v163
  %v424 = vpop.permute.xlu0 %423
  %427 = vset.pattern.permute.xlu0 32
  %428 = vperm.xlu0 %427, %v164
  %v429 = vpop.permute.xlu0 %428
  %432 = vset.pattern.permute.xlu0 32
  %433 = vperm.xlu0 %432, %v165
  %v434 = vpop.permute.xlu0 %433
  %v436 = vsel %vm226, %v154, 0
  %v438 = vsel %vm226, %v155, 0
  %v440 = vsel %vm226, %v156, 0
  %v442 = vsel %vm226, %v157, 0
  %v444 = vsel %vm226, %v158, 0
  %v446 = vsel %vm226, %v159, 0
  %v448 = vsel %vm226, %v160, 0
  %v450 = vsel %vm226, %v161, 0
  %v452 = vsel %vm226, %v162, 0
  %v454 = vsel %vm226, %v163, 0
  %v456 = vsel %vm226, %v164, 0
  %v458 = vsel %vm226, %v165, 0
  %460 = vmatprep.subr.mxu0 0.0
  %461 = vmatpush1.msra.mxu0 %v16
  %462 = vmatprep.subr.mxu0 0.0
  %463 = vmatpush1.msra.mxu0 %v17
  %464 = vmatprep.subr.mxu0 0.0
  %465 = vmatpush1.msra.mxu0 %v18
  %466 = vmatprep.subr.mxu0 0.0
  %467 = vmatpush1.msra.mxu0 %v19
  %468 = vmatprep.subr.mxu0 0.0
  %469 = vmatpush1.msra.mxu0 0.0
  %470 = vmatprep.subr.mxu0 0.0
  %471 = vmatpush1.msra.mxu0 0.0
  %472 = vmatprep.subr.mxu0 0.0
  %473 = vmatpush1.msra.mxu0 0.0
  %474 = vmatprep.subr.mxu0 0.0
  %475 = vmatpush1.msra.mxu0 0.0
  %476 = vmatprep.subr.mxu0 0.0
  %477 = vmatpush1.msra.mxu0 0.0
  %478 = vmatprep.subr.mxu0 0.0
  %479 = vmatpush1.msra.mxu0 0.0
  %480 = vmatprep.subr.mxu0 0.0
  %481 = vmatpush1.msra.mxu0 0.0
  %482 = vmatprep.subr.mxu0 0.0
  %483 = vmatpush1.msra.mxu0 0.0
  %484 = vmatprep.subr.mxu0 0.0
  %485 = vmatpush1.msra.mxu0 0.0
  %486 = vmatprep.subr.mxu0 0.0
  %487 = vmatpush1.msra.mxu0 0.0
  %488 = vmatprep.subr.mxu0 0.0
  %489 = vmatpush1.msra.mxu0 0.0
  %490 = vmatprep.subr.mxu0 0.0
  %491 = vmatpush1.msra.mxu0 0.0
  %492 = vmatprep.subr.mxu0 0.0
  %493 = vmatpush1.msra.mxu0 0.0
  %494 = vmatprep.subr.mxu0 0.0
  %495 = vmatpush1.msra.mxu0 0.0
  %496 = vmatprep.subr.mxu0 0.0
  %497 = vmatpush1.msra.mxu0 0.0
  %498 = vmatprep.subr.mxu0 0.0
  %499 = vmatpush1.msra.mxu0 0.0
  %500 = vmatprep.subr.mxu0 0.0
  %501 = vmatpush1.msra.mxu0 0.0
  %502 = vmatprep.subr.mxu0 0.0
  %503 = vmatpush1.msra.mxu0 0.0
  %504 = vmatprep.subr.mxu0 0.0
  %505 = vmatpush1.msra.mxu0 0.0
  %506 = vmatprep.subr.mxu0 0.0
  %507 = vmatpush1.msra.mxu0 0.0
  %508 = vmatprep.subr.mxu0 0.0
  %509 = vmatpush1.msra.mxu0 0.0
  %510 = vmatprep.subr.mxu0 0.0
  %511 = vmatpush1.msra.mxu0 0.0
  %512 = vmatprep.subr.mxu0 0.0
  %513 = vmatpush1.msra.mxu0 0.0
  %514 = vmatprep.subr.mxu0 0.0
  %515 = vmatpush1.msra.mxu0 0.0
  %516 = vmatprep.subr.mxu0 0.0
  %517 = vmatpush1.msra.mxu0 0.0
  %518 = vmatprep.subr.mxu0 0.0
  %519 = vmatpush1.msra.mxu0 0.0
  %520 = vmatprep.subr.mxu0 0.0
  %521 = vmatpush1.msra.mxu0 0.0
  %522 = vmatprep.subr.mxu0 0.0
  %523 = vmatpush1.msra.mxu0 0.0
  %524 = vmatprep.mubr.f32.mxu0 0.0
  %525 = vmatmul.mubr.f32.gmra.mrb[0].mxu0 %v436
  %v526 = vpop.f32.mrb[0].mxu0
  %v527 = vadd.f32 %v379, %v526
  %v528 = vpop.f32.mrb[0].mxu0
  %529 = vmatprep.mubr.f32.mxu0 0.0
  %530 = vmatmul.mubr.f32.gmra.mrb[0].mxu0 %v438
  %v531 = vpop.f32.mrb[0].mxu0
  %v532 = vadd.f32 %v384, %v531
  %v533 = vpop.f32.mrb[0].mxu0
  %534 = vmatprep.mubr.f32.mxu0 0.0
  %535 = vmatmul.mubr.f32.gmra.mrb[0].mxu0 %v440
  %v536 = vpop.f32.mrb[0].mxu0
  %v537 = vadd.f32 %v389, %v536
  %v538 = vpop.f32.mrb[0].mxu0
  %539 = vmatprep.mubr.f32.mxu0 0.0
  %540 = vmatmul.mubr.f32.gmra.mrb[0].mxu0 %v442
  %v541 = vpop.f32.mrb[0].mxu0
  %v542 = vadd.f32 %v394, %v541
  %v543 = vpop.f32.mrb[0].mxu0
  %544 = vmatprep.mubr.f32.mxu0 0.0
  %545 = vmatmul.mubr.f32.gmra.mrb[0].mxu0 %v444
  %v546 = vpop.f32.mrb[0].mxu0
  %v547 = vadd.f32 %v399, %v546
  %v548 = vpop.f32.mrb[0].mxu0
  %549 = vmatprep.mubr.f32.mxu0 0.0
  %550 = vmatmul.mubr.f32.gmra.mrb[0].mxu0 %v446
  %v551 = vpop.f32.mrb[0].mxu0
  %v552 = vadd.f32 %v404, %v551
  %v553 = vpop.f32.mrb[0].mxu0
  %554 = vmatprep.mubr.f32.mxu0 0.0
  %555 = vmatmul.mubr.f32.gmra.mrb[0].mxu0 %v448
  %v556 = vpop.f32.mrb[0].mxu0
  %v557 = vadd.f32 %v409, %v556
  %v558 = vpop.f32.mrb[0].mxu0
  %559 = vmatprep.mubr.f32.mxu0 0.0
  %560 = vmatmul.mubr.f32.gmra.mrb[0].mxu0 %v450
  %v561 = vpop.f32.mrb[0].mxu0
  %v562 = vadd.f32 %v414, %v561
  %v563 = vpop.f32.mrb[0].mxu0
  %564 = vmatprep.mubr.f32.mxu0 0.0
  %565 = vmatmul.mubr.f32.gmra.mrb[0].mxu0 %v452
  %v566 = vpop.f32.mrb[0].mxu0
  %v567 = vadd.f32 %v419, %v566
  %v568 = vpop.f32.mrb[0].mxu0
  %569 = vmatprep.mubr.f32.mxu0 0.0
  %570 = vmatmul.mubr.f32.gmra.mrb[0].mxu0 %v454
  %v571 = vpop.f32.mrb[0].mxu0
  %v572 = vadd.f32 %v424, %v571
  %v573 = vpop.f32.mrb[0].mxu0
  %574 = vmatprep.mubr.f32.mxu0 0.0
  %575 = vmatmul.mubr.f32.gmra.mrb[0].mxu0 %v456
  %v576 = vpop.f32.mrb[0].mxu0
  %v577 = vadd.f32 %v429, %v576
  %v578 = vpop.f32.mrb[0].mxu0
  %579 = vmatprep.mubr.f32.mxu0 0.0
  %580 = vmatmul.mubr.f32.gmra.mrb[0].mxu0 %v458
  %v581 = vpop.f32.mrb[0].mxu0
  %v582 = vadd.f32 %v434, %v581
  %v583 = vpop.f32.mrb[0].mxu0
  %584 = vdwg.mxu0
  %v585 = vadd.f32 %v318, %v527
  %v586 = vadd.f32 %v323, %v532
  %v587 = vadd.f32 %v328, %v537
  %v588 = vadd.f32 %v333, %v542
  %v589 = vxor.u32 %v585, 2147483648
  %v590 = vxor.u32 %v586, 2147483648
  %v591 = vxor.u32 %v587, 2147483648
  %v592 = vxor.u32 %v588, 2147483648
  %v593 = vmul.f32 %v589, 1.442695
  %v594 = vpow.pop %v593
  %v595 = vmul.f32 %v590, 1.442695
  %v596 = vpow.pop %v595
  %v597 = vmul.f32 %v591, 1.442695
  %v598 = vpow.pop %v597
  %v599 = vmul.f32 %v592, 1.442695
  %v600 = vpow.pop %v599
  %v601 = vadd.f32 %v594, 1.0
  %v602 = vadd.f32 %v596, 1.0
  %v603 = vadd.f32 %v598, 1.0
  %v604 = vadd.f32 %v600, 1.0
  %v605 = vrcp.pop %v601
  %v606 = vmul.f32 1.0, %v605
  %v607 = vrcp.pop %v602
  %v608 = vmul.f32 1.0, %v607
  %v609 = vrcp.pop %v603
  %v610 = vmul.f32 1.0, %v609
  %v611 = vrcp.pop %v604
  %v612 = vmul.f32 1.0, %v611
  %v613 = vadd.f32 %v338, %v547
  %v614 = vadd.f32 %v343, %v552
  %v615 = vadd.f32 %v348, %v557
  %v616 = vadd.f32 %v353, %v562
  %v617 = vxor.u32 %v613, 2147483648
  %v618 = vxor.u32 %v614, 2147483648
  %v619 = vxor.u32 %v615, 2147483648
  %v620 = vxor.u32 %v616, 2147483648
  %v621 = vmul.f32 %v617, 1.442695
  %v622 = vpow.pop %v621
  %v623 = vmul.f32 %v618, 1.442695
  %v624 = vpow.pop %v623
  %v625 = vmul.f32 %v619, 1.442695
  %v626 = vpow.pop %v625
  %v627 = vmul.f32 %v620, 1.442695
  %v628 = vpow.pop %v627
  %v629 = vadd.f32 %v622, 1.0
  %v630 = vadd.f32 %v624, 1.0
  %v631 = vadd.f32 %v626, 1.0
  %v632 = vadd.f32 %v628, 1.0
  %v633 = vrcp.pop %v629
  %v634 = vmul.f32 1.0, %v633
  %v635 = vrcp.pop %v630
  %v636 = vmul.f32 1.0, %v635
  %v637 = vrcp.pop %v631
  %v638 = vmul.f32 1.0, %v637
  %v639 = vrcp.pop %v632
  %v640 = vmul.f32 1.0, %v639
  %v641 = vmul.f32 %v606, %v567
  %v642 = vmul.f32 %v608, %v572
  %v643 = vmul.f32 %v610, %v577
  %v644 = vmul.f32 %v612, %v582
  %v645 = vadd.f32 %v358, %v641
  %v646 = vadd.f32 %v363, %v642
  %v647 = vadd.f32 %v368, %v643
  %v648 = vadd.f32 %v373, %v644
  %v649 = vtanh.pop %v645
  %v650 = vtanh.pop %v646
  %v651 = vtanh.pop %v647
  %v652 = vtanh.pop %v648
  %v653 = vsub.f32 1.0, %v634
  %v654 = vsub.f32 1.0, %v636
  %v655 = vsub.f32 1.0, %v638
  %v656 = vsub.f32 1.0, %v640
  %v657 = vmul.f32 %v653, %v649
  %v658 = vmul.f32 %v654, %v650
  %v659 = vmul.f32 %v655, %v651
  %v660 = vmul.f32 %v656, %v652
  %v661 = vmul.f32 %v634, %v16
  %v662 = vmul.f32 %v636, %v17
  %v663 = vmul.f32 %v638, %v18
  %v664 = vmul.f32 %v640, %v19
  %v665 = vadd.f32 %v657, %v661
  %v666 = vadd.f32 %v658, %v662
  %v667 = vadd.f32 %v659, %v663
  %v668 = vadd.f32 %v660, %v664
  %669 = vst [vmem:[%s3] sm:$0xff] %v665
  %670 = vst [vmem:[%s3 + $0x8] sm:$0xff] %v666
  %671 = vst [vmem:[%s3 + $0x10] sm:$0xff] %v667
  %672 = vst [vmem:[%s3 + $0x18] sm:$0xff] %v668
  // Predicated region
  $region14: #{fwd.1} parent=0 // pred_check
    _
  $region15: #{fwd.1} parent=0 // pred_check_branch
    %674 = sbr.rel (0) target = $region17
  $region16: #{fwd.1} parent=0 // pred_region
    _
  $region17: #{fwd.1} parent=0 // pred_fallthru
    _
  // Predicated region
  $region18: #{fwd.1} parent=0 // pred_check
    _
  $region19: #{fwd.1} parent=0 // pred_check_branch
    %676 = sbr.rel (0) target = $region21
  $region20: #{fwd.1} parent=0 // pred_region
    _
  $region21: #{fwd.1} parent=0 // pred_fallthru
    _

</llo_original>
